<compile_context>
chip_gen: v7x
topology: tpu7x:2x2x1
jax: 0.10.0
libtpu: 0.0.40
codegen_flags: <defaults>
</compile_context>

<pallas_src>
import math
import functools

import jax
import jax.numpy as jnp
from jax import lax
from jax.experimental import pallas as pl
from jax.experimental.pallas import tpu as pltpu


# Finite causal-mask sentinel: exp(-1e30 - m) underflows to exactly 0 and avoids
# inf - inf = NaN hazards in the online-softmax rescaling.
_MASK_VALUE = -1e30


# --------------------------------------------------------------------------------------
# Pass 1: fused QKV projection -> head-major layout (no in-kernel transposes)
# --------------------------------------------------------------------------------------
def _qkv_proj_kernel(x_ref, wt_ref, b_ref, o_ref, *, dh):
    """x_ref: (1, TS, d_model); wt_ref: (d_model, cols); b_ref: (1, cols);
    o_ref: (nj, 1, hh, TS, dh) slice of the (3, B, h, S, dh) head-major QKV array.

    Per-head static column slices + direct stores (no reshape/swapaxes -> no XLU
    relayout; per performance review)."""
    x = x_ref[0]                                               # (TS, d_model)
    acc = jnp.dot(x, wt_ref[...], preferred_element_type=jnp.float32)
    acc = acc + b_ref[...].astype(jnp.float32)                 # broadcast bias row
    nj = o_ref.shape[0]
    hh = o_ref.shape[2]
    for j in range(nj):                                        # static loops
        for i in range(hh):
            c0 = (j * hh + i) * dh
            o_ref[j, 0, i] = acc[:, c0:c0 + dh].astype(o_ref.dtype)


# --------------------------------------------------------------------------------------
# Pass 2: causal flash attention over lower-triangular tile pairs only
# --------------------------------------------------------------------------------------
def _flash_attn_kernel(qi_tbl, ki_tbl, q_ref, k_ref, v_ref, *rest, tq, tk, fold):
    """qi_tbl/ki_tbl: scalar-prefetched (n_pairs,) int32 tables of (q_tile, kv_tile)
    lower-triangular pairs.  q_ref/k_ref/v_ref: (1, 1, h, T, dh) head-major blocks.
    If fold: rest = (wl_ref (h, dh, d_model), bl_ref (1, d_model), o_ref (1, TQ, d_model),
                     m, l, acc scratch);  else rest = (o_ref (1, h, TQ, dh), m, l, acc)."""
    if fold:
        wl_ref, bl_ref, o_ref, m_scr, l_scr, acc_scr = rest
    else:
        o_ref, m_scr, l_scr, acc_scr = rest

    t = pl.program_id(1)
    qi = qi_tbl[t]
    ki = ki_tbl[t]
    f32 = jnp.float32

    @pl.when(ki == 0)
    def _init():
        m_scr[...] = jnp.full_like(m_scr, _MASK_VALUE)
        l_scr[...] = jnp.zeros_like(l_scr)
        acc_scr[...] = jnp.zeros_like(acc_scr)

    q = q_ref[0, 0]                                            # (h, tq, dh)
    k = k_ref[0, 0]                                            # (h, tk, dh)
    v = v_ref[0, 0]                                            # (h, tk, dh)

    # sm_scale (1/sqrt(d_model)) is folded into the Q projection weights host-side,
    # so there is no per-step multiply here.
    s = jnp.einsum('hqd,hkd->hqk', q, k, preferred_element_type=f32)

    def _accumulate(scores):
        m_prev = m_scr[...]                                    # (h, tq, 1)
        m_new = jnp.maximum(m_prev, jnp.max(scores, axis=-1, keepdims=True))
        alpha = jnp.exp(m_prev - m_new)
        p = jnp.exp(scores - m_new)                            # (h, tq, tk) f32
        l_scr[...] = alpha * l_scr[...] + jnp.sum(p, axis=-1, keepdims=True)
        acc_scr[...] = alpha * acc_scr[...] + jnp.einsum(
            'hqk,hkd->hqd', p.astype(v.dtype), v, preferred_element_type=f32)
        m_scr[...] = m_new

    # Only the tile that straddles the causal diagonal needs the iota/compare/select
    # mask work; interior (fully-unmasked) tiles take the fast path.
    needs_mask = (ki + 1) * tk - 1 > qi * tq

    @pl.when(needs_mask)
    def _masked_tile():
        row = qi * tq + lax.broadcasted_iota(jnp.int32, (tq, tk), 0)
        col = ki * tk + lax.broadcasted_iota(jnp.int32, (tq, tk), 1)
        _accumulate(jnp.where((col > row)[None, :, :], _MASK_VALUE, s))

    @pl.when(jnp.logical_not(needs_mask))
    def _interior_tile():
        _accumulate(s)

    last_ki = ((qi + 1) * tq - 1) // tk                        # last kv tile for this q row

    @pl.when(ki == last_ki)
    def _finalize():
        # Every query row sees its own key (causal), so l > 0; approx reciprocal routes
        # to the EUP slot (free vs the VALU Newton sequence).
        inv_l = pl.reciprocal(l_scr[...], approx=True)
        ctx = acc_scr[...] * inv_l                             # (h, tq, dh) f32
        if fold:
            # Fold l_proj per head: no head concat / transpose; lane-dense store.
            # NOTE: kept as an unrolled per-head dot chain (single-contraction matmuls
            # only) -- a multi-contracting-dim einsum is not reliably lowerable on TPU.
            out = bl_ref[...].astype(jnp.float32)              # (1, d_model), broadcasts
            for i in range(ctx.shape[0]):
                out = out + jnp.dot(ctx[i].astype(wl_ref.dtype), wl_ref[i],
                                    preferred_element_type=jnp.float32)
            o_ref[0] = out.astype(o_ref.dtype)
        else:
            o_ref[0] = ctx.astype(o_ref.dtype)
        # TODO(synk): attention-prob dropout and output dropout are identity in eval
        # mode; no RNG applied.


# --------------------------------------------------------------------------------------
# Pass 3 (large d_model only): output projection with W_l streamed in column slabs
# --------------------------------------------------------------------------------------
def _out_proj_kernel(ctx_ref, wl_ref, bl_ref, o_ref):
    """ctx_ref: (1, h, TQ, dh) head-major context; wl_ref: (h, dh, TM); bl_ref: (1, TM);
    o_ref: (1, TQ, TM)."""
    ctx = ctx_ref[0]                                           # (h, tq, dh)
    out = bl_ref[...].astype(jnp.float32)                      # (1, tm), broadcasts
    for i in range(ctx.shape[0]):
        out = out + jnp.dot(ctx[i], wl_ref[i], preferred_element_type=jnp.float32)
    o_ref[0] = out.astype(o_ref.dtype)


# --------------------------------------------------------------------------------------
# Host-side helpers
# --------------------------------------------------------------------------------------
def _hw_defaults():
    """(vmem_limit_bytes, q_tile, kv_tile, proj_tile) per TPU generation.
    v5e/v6e (128 MiB VMEM): raise the scoped limit and use a 512-row Q tile to halve
    K/V re-reads.  v7x / unknown (64 MiB VMEM): leave compiler headroom (48 MiB) and
    keep 256-row tiles."""
    cap = None
    try:
        info = pltpu.get_tpu_info()
        cap = getattr(info, "vmem_capacity_bytes", None)
    except Exception:
        cap = None
    if cap is not None and cap >= 100 * 1024 * 1024:
        return 100 * 1024 * 1024, 512, 256, 512
    return 48 * 1024 * 1024, 256, 256, 256


def _pick_tile(s, pref):
    """Largest tile <= pref that divides s and is a multiple of 8 (or s itself when
    s <= pref).  Raises for awkward lengths instead of silently blowing VMEM."""
    if s <= pref:
        return s
    start = pref - (pref % 8)
    for t in range(start, 0, -8):
        if s % t == 0:
            return t
    raise ValueError(
        f"sequence length {s} has no tile that is a multiple of 8 and <= {pref}; "
        "pad the sequence to a multiple of 8")


def _aligned_divisor(n, pref, align):
    """Largest divisor of n that is a multiple of `align` and <= pref; falls back to n."""
    best = None
    t = align
    limit = min(n, pref)
    while t <= limit:
        if n % t == 0:
            best = t
        t += align
    return best if best is not None else n


# --------------------------------------------------------------------------------------
# Wrapper
# --------------------------------------------------------------------------------------
def multi_head_attention(x, w_qkv, b_qkv, w_l, b_l, *, h,
                         q_tile=None, kv_tile=None, proj_tile=None, qkv_dtype=None):
    """x: (B, S, d_model); w_qkv: (3*d_model, d_model); b_qkv: (3*d_model,);
    w_l: (d_model, d_model) [module requires h*d_V == d_model]; b_l: (d_model,).
    qkv_dtype: optional storage dtype for the projected Q/K/V (e.g. bf16 for f32 models
    on v6e/v7x); defaults to x.dtype."""
    B, S, d_model = x.shape
    assert d_model % h == 0, "d_model must be divisible by h"
    dh = d_model // h
    assert w_qkv.shape == (3 * d_model, d_model)
    assert b_qkv.shape == (3 * d_model,)
    assert w_l.shape == (d_model, d_model), "l_proj requires h * d_V == d_model"
    assert b_l.shape == (d_model,)

    dtype = x.dtype
    head_dtype = jnp.dtype(qkv_dtype) if qkv_dtype is not None else dtype
    isz = jnp.dtype(dtype).itemsize

    vmem_limit, q_def, kv_def, proj_def = _hw_defaults()
    ts = _pick_tile(S, proj_tile or proj_def)
    tq = _pick_tile(S, q_tile or q_def)
    tk = _pick_tile(S, kv_tile or kv_def)

    # Module quirk: d_k = K.size(-1) is taken BEFORE the head split -> 1/sqrt(d_model).
    # Fold the scale into the Q slab of the fused weights/bias (one-time host op);
    # removes the per-step VPU multiply from the flash inner loop.
    sm_scale = 1.0 / math.sqrt(d_model)
    scale = jnp.concatenate([jnp.full((d_model,), sm_scale, jnp.float32),
                             jnp.ones((2 * d_model,), jnp.float32)])
    wqkv_t = (w_qkv.astype(jnp.float32).T * scale[None, :]).astype(dtype)   # (d_model, 3*d_model)
    bqkv_2d = (b_qkv.astype(jnp.float32) * scale).reshape(1, 3 * d_model).astype(dtype)
    wl_r = w_l.T.reshape(h, dh, d_model).astype(dtype)                      # (h, dh, d_model)
    bl_2d = b_l.reshape(1, d_model).astype(dtype)

    # ---------------- Pass 1: fused QKV projection (column-slab streamed) ------------
    qkv_w_bytes = d_model * 3 * d_model * isz
    w_budget = min(16 * 1024 * 1024, vmem_limit // 3)
    if qkv_w_bytes <= w_budget:
        cols = 3 * d_model                      # whole fused weight stays resident
    else:
        align = dh * 128 // math.gcd(dh, 128)   # lane-aligned, whole heads per slab
        pref = max(align, w_budget // (2 * d_model * isz))
        cols = _aligned_divisor(d_model, pref, align)
        if cols == d_model and d_model % 128 != 0:
            cols = 3 * d_model                  # no aligned tiling possible; keep resident
    n_g = (3 * d_model) // cols
    n_s = S // ts

    if cols == 3 * d_model:
        wt_spec = pl.BlockSpec((d_model, 3 * d_model), lambda b, gi, si: (0, 0))
        bq_spec = pl.BlockSpec((1, 3 * d_model), lambda b, gi, si: (0, 0))
        out1_spec = pl.BlockSpec((3, 1, h, ts, dh), lambda b, gi, si: (0, b, 0, si, 0))
    else:
        hh = cols // dh
        n_h = d_model // cols
        wt_spec = pl.BlockSpec((d_model, cols), lambda b, gi, si: (0, gi))
        bq_spec = pl.BlockSpec((1, cols), lambda b, gi, si: (0, gi))
        out1_spec = pl.BlockSpec(
            (1, 1, hh, ts, dh),
            lambda b, gi, si: (gi // n_h, b, gi % n_h, si, 0))

    qkv_cost = pl.CostEstimate(
        flops=2 * B * S * d_model * 3 * d_model + B * S * 3 * d_model,
        transcendentals=0,
        bytes_accessed=isz * (B * S * d_model + 3 * d_model * d_model
                              + 3 * d_model + 3 * B * S * d_model))
    qkv_heads = pl.pallas_call(
        functools.partial(_qkv_proj_kernel, dh=dh),
        out_shape=jax.ShapeDtypeStruct((3, B, h, S, dh), head_dtype),
        grid=(B, n_g, n_s),
        in_specs=[
            pl.BlockSpec((1, ts, d_model), lambda b, gi, si: (b, si, 0)),   # x tile
            wt_spec,                                                        # W_qkv^T slab
            bq_spec,                                                        # b_qkv slab
        ],
        out_specs=out1_spec,
        compiler_params=pltpu.CompilerParams(
            dimension_semantics=("parallel", "parallel", "parallel"),
            vmem_limit_bytes=vmem_limit),
        cost_estimate=qkv_cost,
    )(x, wqkv_t, bqkv_2d)

    # ---------------- Pass 2: causal flash attention (lower-triangular pairs) --------
    n_q = S // tq
    wl_bytes = d_model * d_model * isz
    fold_proj = wl_bytes <= min(16 * 1024 * 1024, vmem_limit // 4)

    # Enumerate only the (q_tile, kv_tile) pairs at-or-below the causal diagonal and
    # drive the index_maps from scalar-prefetched tables -> no wasted grid steps.
    pairs_qi, pairs_ki = [], []
    for qi in range(n_q):
        for ki in range(((qi + 1) * tq - 1) // tk + 1):
            pairs_qi.append(qi)
            pairs_ki.append(ki)
    n_pairs = len(pairs_qi)
    qi_tbl = jnp.asarray(pairs_qi, dtype=jnp.int32)
    ki_tbl = jnp.asarray(pairs_ki, dtype=jnp.int32)

    def _q_map(b, t, qi_t, ki_t):
        return (0, b, 0, qi_t[t], 0)

    def _k_map(b, t, qi_t, ki_t):
        return (1, b, 0, ki_t[t], 0)

    def _v_map(b, t, qi_t, ki_t):
        return (2, b, 0, ki_t[t], 0)

    in_specs = [
        pl.BlockSpec((1, 1, h, tq, dh), _q_map),
        pl.BlockSpec((1, 1, h, tk, dh), _k_map),
        pl.BlockSpec((1, 1, h, tk, dh), _v_map),
    ]
    attn_inputs = [qkv_heads, qkv_heads, qkv_heads]
    if fold_proj:
        in_specs += [
            pl.BlockSpec((h, dh, d_model), lambda b, t, qi_t, ki_t: (0, 0, 0)),
            pl.BlockSpec((1, d_model), lambda b, t, qi_t, ki_t: (0, 0)),
        ]
        attn_inputs += [wl_r, bl_2d]
        attn_out_shape = jax.ShapeDtypeStruct((B, S, d_model), dtype)
        attn_out_spec = pl.BlockSpec((1, tq, d_model),
                                     lambda b, t, qi_t, ki_t: (b, qi_t[t], 0))
    else:
        attn_out_shape = jax.ShapeDtypeStruct((B, h, S, dh), dtype)
        attn_out_spec = pl.BlockSpec((1, h, tq, dh),
                                     lambda b, t, qi_t, ki_t: (b, 0, qi_t[t], 0))

    attn_cost = pl.CostEstimate(
        flops=4 * B * h * n_pairs * tq * tk * dh
              + (2 * B * S * d_model * d_model if fold_proj else 0),
        transcendentals=B * h * n_pairs * tq * tk,
        bytes_accessed=isz * (3 * B * S * d_model + B * S * d_model
                              + (d_model * d_model + d_model if fold_proj else 0)))
    attn_out = pl.pallas_call(
        functools.partial(_flash_attn_kernel, tq=tq, tk=tk, fold=fold_proj),
        out_shape=attn_out_shape,
        grid_spec=pltpu.PrefetchScalarGridSpec(
            num_scalar_prefetch=2,
            grid=(B, n_pairs),
            in_specs=in_specs,
            out_specs=attn_out_spec,
            scratch_shapes=[
                pltpu.VMEM((h, tq, 1), jnp.float32),    # running max  m
                pltpu.VMEM((h, tq, 1), jnp.float32),    # running sum  l
                pltpu.VMEM((h, tq, dh), jnp.float32),   # running acc
            ]),
        compiler_params=pltpu.CompilerParams(
            dimension_semantics=("parallel", "arbitrary"),
            vmem_limit_bytes=vmem_limit),
        cost_estimate=attn_cost,
    )(qi_tbl, ki_tbl, *attn_inputs)

    if fold_proj:
        return attn_out

    # ---------------- Pass 3 (large d_model): tiled output projection ----------------
    tm = _aligned_divisor(d_model, 1024, 128)
    n_m = d_model // tm
    out = pl.pallas_call(
        _out_proj_kernel,
        out_shape=jax.ShapeDtypeStruct((B, S, d_model), dtype),
        grid=(B, n_q, n_m),
        in_specs=[
            pl.BlockSpec((1, h, tq, dh), lambda b, qi, mi: (b, 0, qi, 0)),  # ctx heads
            pl.BlockSpec((h, dh, tm), lambda b, qi, mi: (0, 0, mi)),        # W_l slab
            pl.BlockSpec((1, tm), lambda b, qi, mi: (0, mi)),               # b_l slab
        ],
        out_specs=pl.BlockSpec((1, tq, tm), lambda b, qi, mi: (b, qi, mi)),
        compiler_params=pltpu.CompilerParams(
            dimension_semantics=("parallel", "parallel", "parallel"),
            vmem_limit_bytes=vmem_limit),
    )(attn_out, wl_r, bl_2d)
    return out


# --------------------------------------------------------------------------------------
# Pure-JAX reference (transcription of MultiHeadAttentionModule.forward, eval mode)
# --------------------------------------------------------------------------------------
def _reference(x, w_qkv, b_qkv, w_l, b_l, h):
    B, S, d_model = x.shape
    dh = d_model // h
    qkv = x @ w_qkv.T + b_qkv
    Q, K, V = jnp.split(qkv, 3, axis=-1)
    d_k = d_model                           # taken before the head reshape, as in the module
    heads = lambda t: jnp.transpose(t.reshape(B, S, h, dh), (0, 2, 1, 3))
    Q, K, V = heads(Q), heads(K), heads(V)
    scores = (Q @ jnp.swapaxes(K, -1, -2)) / math.sqrt(d_k)
    mask = jnp.triu(jnp.ones((S, S), bool), k=1)
    scores = jnp.where(mask, -jnp.inf, scores)
    attn = jax.nn.softmax(scores, axis=-1)
    ctx = attn @ V
    ctx = jnp.transpose(ctx, (0, 2, 1, 3)).reshape(B, S, d_model)
    return ctx @ w_l.T + b_l


if __name__ == "__main__":
    # Small shapes consistent with the module: d_model divisible by h, h*d_V == d_model.
    B, S, d_model, h = 2, 8, 32, 4
    d_V = d_model // h

    key = jax.random.PRNGKey(0)
    kx, kw1, kb1, kw2, kb2 = jax.random.split(key, 5)
    x = jax.random.normal(kx, (B, S, d_model), jnp.float32)

    lim1 = 1.0 / math.sqrt(d_model)
    w_qkv = jax.random.uniform(kw1, (3 * d_model, d_model), jnp.float32, -lim1, lim1)
    b_qkv = jax.random.uniform(kb1, (3 * d_model,), jnp.float32, -lim1, lim1)
    lim2 = 1.0 / math.sqrt(h * d_V)
    w_l = jax.random.uniform(kw2, (d_model, h * d_V), jnp.float32, -lim2, lim2)
    b_l = jax.random.uniform(kb2, (d_model,), jnp.float32, -lim2, lim2)

    out = multi_head_attention(x, w_qkv, b_qkv, w_l, b_l, h=h)
    out = jax.block_until_ready(out)

    ref = _reference(x, w_qkv, b_qkv, w_l, b_l, h)
    assert out.shape == (B, S, d_model)
    err = float(jnp.max(jnp.abs(out - ref)))
    # Slightly relaxed vs f32 exact: approx EUP reciprocal + folded scale reassociation.
    assert jnp.allclose(out, ref, atol=2e-3, rtol=2e-3), f"mismatch vs reference: {err}"

    print("KERNEL_OK")
</pallas_src>

<mosaic_0001>
module attributes {stable_mosaic.version = 11 : i64} {
  func.func @_qkv_proj_kernel(%arg0: i32, %arg1: i32, %arg2: i32, %arg3: memref<1x8x32xf32, #tpu.memory_space<vmem>>, %arg4: memref<32x96xf32, #tpu.memory_space<vmem>>, %arg5: memref<1x96xf32, #tpu.memory_space<vmem>>, %arg6: memref<3x1x4x8x8xf32, #tpu.memory_space<vmem>>) attributes {dimension_semantics = [#tpu.dimension_semantics<parallel>, #tpu.dimension_semantics<parallel>, #tpu.dimension_semantics<parallel>], iteration_bounds = array<i64: 2, 1, 1>, scalar_prefetch = 0 : i64, scratch_operands = 0 : i64, tpu.core_type = #tpu.core_type<tc>, window_params = [{transform_indices = @transform_0, window_bounds = array<i64: 1, 8, 32>}, {pipeline_mode = #tpu.pipeline_mode<synchronous>, transform_indices = @transform_1, window_bounds = array<i64: 32, 96>}, {pipeline_mode = #tpu.pipeline_mode<synchronous>, transform_indices = @transform_2, window_bounds = array<i64: 1, 96>}, {transform_indices = @transform_3, window_bounds = array<i64: 3, 1, 4, 8, 8>}]} {
    %c0 = arith.constant 0 : index
    %c0_0 = arith.constant 0 : index
    %c0_1 = arith.constant 0 : index
    %0 = vector.load %arg3[%c0, %c0_0, %c0_1] : memref<1x8x32xf32, #tpu.memory_space<vmem>>, vector<1x8x32xf32>
    %1 = vector.shape_cast %0 : vector<1x8x32xf32> to vector<8x32xf32>
    %c0_2 = arith.constant 0 : index
    %c0_3 = arith.constant 0 : index
    %2 = vector.load %arg4[%c0_2, %c0_3] : memref<32x96xf32, #tpu.memory_space<vmem>>, vector<32x96xf32>
    %cst = arith.constant dense<0.000000e+00> : vector<8x96xf32>
    %3 = tpu.matmul %1, %2, %cst {dimension_numbers = #tpu.dot_dimension_numbers<[1], [0], [0], [1], [0, 0, 1, 1], [], []>} : vector<8x32xf32>, vector<32x96xf32>, vector<8x96xf32> -> vector<8x96xf32>
    %c0_4 = arith.constant 0 : index
    %c0_5 = arith.constant 0 : index
    %4 = vector.load %arg5[%c0_4, %c0_5] : memref<1x96xf32, #tpu.memory_space<vmem>>, vector<1x96xf32>
    %5 = vector.broadcast %4 : vector<1x96xf32> to vector<8x96xf32>
    %6 = arith.addf %3, %5 : vector<8x96xf32>
    %7 = vector.extract_strided_slice %6 {offsets = [0, 0], sizes = [8, 8], strides = [1, 1]} : vector<8x96xf32> to vector<8x8xf32>
    %c0_6 = arith.constant 0 : index
    %c0_7 = arith.constant 0 : index
    %c0_8 = arith.constant 0 : index
    %c0_9 = arith.constant 0 : index
    %c0_10 = arith.constant 0 : index
    %8 = vector.load %arg6[%c0_6, %c0_7, %c0_8, %c0_9, %c0_10] : memref<3x1x4x8x8xf32, #tpu.memory_space<vmem>>, vector<1x1x1x8x8xf32>
    %9 = vector.shape_cast %8 : vector<1x1x1x8x8xf32> to vector<8x8xf32>
    %10 = vector.shape_cast %7 : vector<8x8xf32> to vector<1x1x1x8x8xf32>
    tpu.vector_store %arg6[%c0_6, %c0_7, %c0_8, %c0_9, %c0_10], %10 {strides = array<i32>} : memref<3x1x4x8x8xf32, #tpu.memory_space<vmem>>, vector<1x1x1x8x8xf32>,
    %11 = vector.extract_strided_slice %6 {offsets = [0, 8], sizes = [8, 8], strides = [1, 1]} : vector<8x96xf32> to vector<8x8xf32>
    %c0_11 = arith.constant 0 : index
    %c0_12 = arith.constant 0 : index
    %c1 = arith.constant 1 : index
    %c0_13 = arith.constant 0 : index
    %c0_14 = arith.constant 0 : index
    %12 = vector.load %arg6[%c0_11, %c0_12, %c1, %c0_13, %c0_14] : memref<3x1x4x8x8xf32, #tpu.memory_space<vmem>>, vector<1x1x1x8x8xf32>
    %13 = vector.shape_cast %12 : vector<1x1x1x8x8xf32> to vector<8x8xf32>
    %14 = vector.shape_cast %11 : vector<8x8xf32> to vector<1x1x1x8x8xf32>
    tpu.vector_store %arg6[%c0_11, %c0_12, %c1, %c0_13, %c0_14], %14 {strides = array<i32>} : memref<3x1x4x8x8xf32, #tpu.memory_space<vmem>>, vector<1x1x1x8x8xf32>,
    %15 = vector.extract_strided_slice %6 {offsets = [0, 16], sizes = [8, 8], strides = [1, 1]} : vector<8x96xf32> to vector<8x8xf32>
    %c0_15 = arith.constant 0 : index
    %c0_16 = arith.constant 0 : index
    %c2 = arith.constant 2 : index
    %c0_17 = arith.constant 0 : index
    %c0_18 = arith.constant 0 : index
    %16 = vector.load %arg6[%c0_15, %c0_16, %c2, %c0_17, %c0_18] : memref<3x1x4x8x8xf32, #tpu.memory_space<vmem>>, vector<1x1x1x8x8xf32>
    %17 = vector.shape_cast %16 : vector<1x1x1x8x8xf32> to vector<8x8xf32>
    %18 = vector.shape_cast %15 : vector<8x8xf32> to vector<1x1x1x8x8xf32>
    tpu.vector_store %arg6[%c0_15, %c0_16, %c2, %c0_17, %c0_18], %18 {strides = array<i32>} : memref<3x1x4x8x8xf32, #tpu.memory_space<vmem>>, vector<1x1x1x8x8xf32>,
    %19 = vector.extract_strided_slice %6 {offsets = [0, 24], sizes = [8, 8], strides = [1, 1]} : vector<8x96xf32> to vector<8x8xf32>
    %c0_19 = arith.constant 0 : index
    %c0_20 = arith.constant 0 : index
    %c3 = arith.constant 3 : index
    %c0_21 = arith.constant 0 : index
    %c0_22 = arith.constant 0 : index
    %20 = vector.load %arg6[%c0_19, %c0_20, %c3, %c0_21, %c0_22] : memref<3x1x4x8x8xf32, #tpu.memory_space<vmem>>, vector<1x1x1x8x8xf32>
    %21 = vector.shape_cast %20 : vector<1x1x1x8x8xf32> to vector<8x8xf32>
    %22 = vector.shape_cast %19 : vector<8x8xf32> to vector<1x1x1x8x8xf32>
    tpu.vector_store %arg6[%c0_19, %c0_20, %c3, %c0_21, %c0_22], %22 {strides = array<i32>} : memref<3x1x4x8x8xf32, #tpu.memory_space<vmem>>, vector<1x1x1x8x8xf32>,
    %23 = vector.extract_strided_slice %6 {offsets = [0, 32], sizes = [8, 8], strides = [1, 1]} : vector<8x96xf32> to vector<8x8xf32>
    %c1_23 = arith.constant 1 : index
    %c0_24 = arith.constant 0 : index
    %c0_25 = arith.constant 0 : index
    %c0_26 = arith.constant 0 : index
    %c0_27 = arith.constant 0 : index
    %24 = vector.load %arg6[%c1_23, %c0_24, %c0_25, %c0_26, %c0_27] : memref<3x1x4x8x8xf32, #tpu.memory_space<vmem>>, vector<1x1x1x8x8xf32>
    %25 = vector.shape_cast %24 : vector<1x1x1x8x8xf32> to vector<8x8xf32>
    %26 = vector.shape_cast %23 : vector<8x8xf32> to vector<1x1x1x8x8xf32>
    tpu.vector_store %arg6[%c1_23, %c0_24, %c0_25, %c0_26, %c0_27], %26 {strides = array<i32>} : memref<3x1x4x8x8xf32, #tpu.memory_space<vmem>>, vector<1x1x1x8x8xf32>,
    %27 = vector.extract_strided_slice %6 {offsets = [0, 40], sizes = [8, 8], strides = [1, 1]} : vector<8x96xf32> to vector<8x8xf32>
    %c1_28 = arith.constant 1 : index
    %c0_29 = arith.constant 0 : index
    %c1_30 = arith.constant 1 : index
    %c0_31 = arith.constant 0 : index
    %c0_32 = arith.constant 0 : index
    %28 = vector.load %arg6[%c1_28, %c0_29, %c1_30, %c0_31, %c0_32] : memref<3x1x4x8x8xf32, #tpu.memory_space<vmem>>, vector<1x1x1x8x8xf32>
    %29 = vector.shape_cast %28 : vector<1x1x1x8x8xf32> to vector<8x8xf32>
    %30 = vector.shape_cast %27 : vector<8x8xf32> to vector<1x1x1x8x8xf32>
    tpu.vector_store %arg6[%c1_28, %c0_29, %c1_30, %c0_31, %c0_32], %30 {strides = array<i32>} : memref<3x1x4x8x8xf32, #tpu.memory_space<vmem>>, vector<1x1x1x8x8xf32>,
    %31 = vector.extract_strided_slice %6 {offsets = [0, 48], sizes = [8, 8], strides = [1, 1]} : vector<8x96xf32> to vector<8x8xf32>
    %c1_33 = arith.constant 1 : index
    %c0_34 = arith.constant 0 : index
    %c2_35 = arith.constant 2 : index
    %c0_36 = arith.constant 0 : index
    %c0_37 = arith.constant 0 : index
    %32 = vector.load %arg6[%c1_33, %c0_34, %c2_35, %c0_36, %c0_37] : memref<3x1x4x8x8xf32, #tpu.memory_space<vmem>>, vector<1x1x1x8x8xf32>
    %33 = vector.shape_cast %32 : vector<1x1x1x8x8xf32> to vector<8x8xf32>
    %34 = vector.shape_cast %31 : vector<8x8xf32> to vector<1x1x1x8x8xf32>
    tpu.vector_store %arg6[%c1_33, %c0_34, %c2_35, %c0_36, %c0_37], %34 {strides = array<i32>} : memref<3x1x4x8x8xf32, #tpu.memory_space<vmem>>, vector<1x1x1x8x8xf32>,
    %35 = vector.extract_strided_slice %6 {offsets = [0, 56], sizes = [8, 8], strides = [1, 1]} : vector<8x96xf32> to vector<8x8xf32>
    %c1_38 = arith.constant 1 : index
    %c0_39 = arith.constant 0 : index
    %c3_40 = arith.constant 3 : index
    %c0_41 = arith.constant 0 : index
    %c0_42 = arith.constant 0 : index
    %36 = vector.load %arg6[%c1_38, %c0_39, %c3_40, %c0_41, %c0_42] : memref<3x1x4x8x8xf32, #tpu.memory_space<vmem>>, vector<1x1x1x8x8xf32>
    %37 = vector.shape_cast %36 : vector<1x1x1x8x8xf32> to vector<8x8xf32>
    %38 = vector.shape_cast %35 : vector<8x8xf32> to vector<1x1x1x8x8xf32>
    tpu.vector_store %arg6[%c1_38, %c0_39, %c3_40, %c0_41, %c0_42], %38 {strides = array<i32>} : memref<3x1x4x8x8xf32, #tpu.memory_space<vmem>>, vector<1x1x1x8x8xf32>,
    %39 = vector.extract_strided_slice %6 {offsets = [0, 64], sizes = [8, 8], strides = [1, 1]} : vector<8x96xf32> to vector<8x8xf32>
    %c2_43 = arith.constant 2 : index
    %c0_44 = arith.constant 0 : index
    %c0_45 = arith.constant 0 : index
    %c0_46 = arith.constant 0 : index
    %c0_47 = arith.constant 0 : index
    %40 = vector.load %arg6[%c2_43, %c0_44, %c0_45, %c0_46, %c0_47] : memref<3x1x4x8x8xf32, #tpu.memory_space<vmem>>, vector<1x1x1x8x8xf32>
    %41 = vector.shape_cast %40 : vector<1x1x1x8x8xf32> to vector<8x8xf32>
    %42 = vector.shape_cast %39 : vector<8x8xf32> to vector<1x1x1x8x8xf32>
    tpu.vector_store %arg6[%c2_43, %c0_44, %c0_45, %c0_46, %c0_47], %42 {strides = array<i32>} : memref<3x1x4x8x8xf32, #tpu.memory_space<vmem>>, vector<1x1x1x8x8xf32>,
    %43 = vector.extract_strided_slice %6 {offsets = [0, 72], sizes = [8, 8], strides = [1, 1]} : vector<8x96xf32> to vector<8x8xf32>
    %c2_48 = arith.constant 2 : index
    %c0_49 = arith.constant 0 : index
    %c1_50 = arith.constant 1 : index
    %c0_51 = arith.constant 0 : index
    %c0_52 = arith.constant 0 : index
    %44 = vector.load %arg6[%c2_48, %c0_49, %c1_50, %c0_51, %c0_52] : memref<3x1x4x8x8xf32, #tpu.memory_space<vmem>>, vector<1x1x1x8x8xf32>
    %45 = vector.shape_cast %44 : vector<1x1x1x8x8xf32> to vector<8x8xf32>
    %46 = vector.shape_cast %43 : vector<8x8xf32> to vector<1x1x1x8x8xf32>
    tpu.vector_store %arg6[%c2_48, %c0_49, %c1_50, %c0_51, %c0_52], %46 {strides = array<i32>} : memref<3x1x4x8x8xf32, #tpu.memory_space<vmem>>, vector<1x1x1x8x8xf32>,
    %47 = vector.extract_strided_slice %6 {offsets = [0, 80], sizes = [8, 8], strides = [1, 1]} : vector<8x96xf32> to vector<8x8xf32>
    %c2_53 = arith.constant 2 : index
    %c0_54 = arith.constant 0 : index
    %c2_55 = arith.constant 2 : index
    %c0_56 = arith.constant 0 : index
    %c0_57 = arith.constant 0 : index
    %48 = vector.load %arg6[%c2_53, %c0_54, %c2_55, %c0_56, %c0_57] : memref<3x1x4x8x8xf32, #tpu.memory_space<vmem>>, vector<1x1x1x8x8xf32>
    %49 = vector.shape_cast %48 : vector<1x1x1x8x8xf32> to vector<8x8xf32>
    %50 = vector.shape_cast %47 : vector<8x8xf32> to vector<1x1x1x8x8xf32>
    tpu.vector_store %arg6[%c2_53, %c0_54, %c2_55, %c0_56, %c0_57], %50 {strides = array<i32>} : memref<3x1x4x8x8xf32, #tpu.memory_space<vmem>>, vector<1x1x1x8x8xf32>,
    %51 = vector.extract_strided_slice %6 {offsets = [0, 88], sizes = [8, 8], strides = [1, 1]} : vector<8x96xf32> to vector<8x8xf32>
    %c2_58 = arith.constant 2 : index
    %c0_59 = arith.constant 0 : index
    %c3_60 = arith.constant 3 : index
    %c0_61 = arith.constant 0 : index
    %c0_62 = arith.constant 0 : index
    %52 = vector.load %arg6[%c2_58, %c0_59, %c3_60, %c0_61, %c0_62] : memref<3x1x4x8x8xf32, #tpu.memory_space<vmem>>, vector<1x1x1x8x8xf32>
    %53 = vector.shape_cast %52 : vector<1x1x1x8x8xf32> to vector<8x8xf32>
    %54 = vector.shape_cast %51 : vector<8x8xf32> to vector<1x1x1x8x8xf32>
    tpu.vector_store %arg6[%c2_58, %c0_59, %c3_60, %c0_61, %c0_62], %54 {strides = array<i32>} : memref<3x1x4x8x8xf32, #tpu.memory_space<vmem>>, vector<1x1x1x8x8xf32>,
    return
  }
  func.func @transform_0(%arg0: i32, %arg1: i32, %arg2: i32) -> (i32, i32, i32) {
    %c0_i32 = arith.constant 0 : i32
    %c0_i32_0 = arith.constant 0 : i32
    return %arg0, %arg2, %c0_i32 : i32, i32, i32
  }
  func.func @transform_1(%arg0: i32, %arg1: i32, %arg2: i32) -> (i32, i32) {
    %c0_i32 = arith.constant 0 : i32
    %c0_i32_0 = arith.constant 0 : i32
    %c0_i32_1 = arith.constant 0 : i32
    return %c0_i32, %c0_i32_0 : i32, i32
  }
  func.func @transform_2(%arg0: i32, %arg1: i32, %arg2: i32) -> (i32, i32) {
    %c0_i32 = arith.constant 0 : i32
    %c0_i32_0 = arith.constant 0 : i32
    %c0_i32_1 = arith.constant 0 : i32
    return %c0_i32, %c0_i32_0 : i32, i32
  }
  func.func @transform_3(%arg0: i32, %arg1: i32, %arg2: i32) -> (i32, i32, i32, i32, i32) {
    %c0_i32 = arith.constant 0 : i32
    %c0_i32_0 = arith.constant 0 : i32
    %c0_i32_1 = arith.constant 0 : i32
    %c0_i32_2 = arith.constant 0 : i32
    return %c0_i32, %arg0, %c0_i32_0, %arg2, %c0_i32_1 : i32, i32, i32, i32, i32
  }
}

</mosaic_0001>

<llo_original>
// kernel: tpu_custom_call.1
$region0: #{tpu_custom_call.1}
  #allocation0 [shape = 'u32[]', space=smem, size = 0x4, offset = 0x4, fixed_abs, tag = 'smem constant byte address 0x4 - core index']
  #allocation1 [shape = 'u32[144,128]{1,0:T(1,128)}', space=vmem, size = 0x12000, scoped, tag = 'internal scratch']
  #allocation8 [shape = 's32[]', space=sflag, size = 0x4, offset = 0, fixed_abs, tag = 'sflag constant byte address 0x0 - dummy sync flag']
  %s0 = inlined_call_operand.hbm [shape: f32[2,8,32], index: 0, kind: input, shape index: {}]
  %s1 = inlined_call_operand.hbm [shape: f32[32,96], index: 1, kind: input, shape index: {}]
  %s2 = inlined_call_operand.vmem [shape: f32[1,96], index: 2, kind: input, shape index: {}]
  %s3 = inlined_call_operand.hbm [shape: f32[3,2,4,8,8], index: 3, kind: output, shape index: {}]
  %s4 = sld [smem:[#allocation0]]
  $region53: #{tpu_custom_call.1} parent=0
    _
  %s6 = ssub.s32 1, %s4
  %s7 = scalar_select 0, %s6, %s4
  $region1: #{tpu_custom_call.1} parent=0
    #allocation2 [shape = 'u8[8192]{0}', space=vmem, size = 0x2000, scoped, tag = 'input window, operand 0']
    #allocation3 [shape = 's32[2]{0}', space=sflag, size = 0x8, scoped, tag = 'scoped memory for tpu_custom_call.1']
    #allocation4 [shape = 's32[2]{0}', space=sflag, size = 0x8, scoped, tag = 'scoped memory for tpu_custom_call.1']
    #allocation5 [shape = 'u8[16384]{0}', space=vmem, size = 0x4000, scoped, tag = 'input window, operand 1, single buffered']
    #allocation6 [shape = 's32[1]{0}', space=sflag, size = 0x4, scoped, tag = 'scoped memory for tpu_custom_call.1']
    #allocation7 [shape = 'u8[98304]{0}', space=vmem, size = 0x18000, scoped, tag = 'output window, operand 0']
    %8 = vsyncpa [#allocation3], 0
    %s9 = scalar_lea.sflag [#allocation3], 1
    %10 = vsyncpa %s9, 0
    %11 = vsyncpa [#allocation6], 0
    %12 = vsyncpa [#allocation4], 0
    %s13 = scalar_lea.sflag [#allocation4], 1
    %14 = vsyncpa %s13, 0
    loop: start=0, step=1, limit=4
    $region2: #{tpu_custom_call.1} parent=1 // loop_pre_header
      _
    $region3: #{tpu_custom_call.1} parent=1 // loop_header
      %s16 = sphi 0, %s20
      %p17 = scmp.ge.s32.totalorder %s16, 4
      %s23 = sphi 0, %s42
      %s24 = sphi 0, %s38
      %s25 = sphi 0, %s34
      %s26 = sphi 0, %s23
      %s27 = sphi 0, %s24
      %s28 = sphi 0, %s25
      %s29 = sphi 0, %s26
      %s30 = sphi 0, %s27
      %s31 = sphi 0, %s28
      %s47 = sphi 0, %s49
      %s50 = sphi 0, %s47
      %s51 = sphi 0, %s50
      %s67 = sphi 0, %s51
      %s71 = sphi 0, %s71
      %s73 = sphi 0, %s71
      %s74 = sphi 0, %s73
      %s88 = sphi 0, %s74
      %s92 = sphi 0, %s92
      %s94 = sphi 0, %s92
      %s95 = sphi 0, %s94
      %s109 = sphi 0, %s95
      %s117 = sphi 0, %s119
      %s120 = sphi 0, %s117
      %s121 = sphi 0, %s120
      %s137 = sphi 0, %s121
    $region4: #{tpu_custom_call.1} parent=1 // loop_header_branch
      %19 = sbr.rel (%p17) target = $region8
    $region5: #{tpu_custom_call.1} parent=1 // loop_body
      %s21 = ssub.s32 %s16, 1
      %s22 = ssub.s32 %s16, 2
      %s32 = sadd.s32 1, %s25
      %p33 = scmp.ge.s32.totalorder %s32, 1
      %s34 = scalar_select %p33, 0, %s32
      %s35 = sadd.s32 1, %s24
      %s36 = scalar_select %p33, %s35, %s24
      %p37 = scmp.ge.s32.totalorder %s36, 1
      %s38 = scalar_select %p37, 0, %s36
      %s39 = sadd.s32 1, %s23
      %s40 = scalar_select %p37, %s39, %s23
      %p41 = scmp.ge.s32.totalorder %s40, 2
      %s42 = scalar_select %p41, 0, %s40
      %s43 = ssub.s32 %s23, %s42
      %s44 = ssub.s32 %s25, %s34
      %s45 = sor.u32 %s43, %s44
      %p46 = scmp.eq.s32.totalorder %s45, 0
      %s48 = sadd.s32 %s47, 1
      %s49 = scalar_select %p46, %s47, %s48
      %p52 = pneg %p46
      %p53 = scmp.eq.s32.totalorder %s16, 1
      %p54 = por %p52, %p53
      %p55 = scmp.ne.s32.totalorder %s47, %s50
      %p56 = scmp.eq.s32.totalorder %s16, 0
      %p57 = por %p55, %p56
      %p58 = scmp.ne.s32.totalorder %s47, %s50
      %p59 = scmp.eq.s32.totalorder %s21, 1
      %p60 = por %p58, %p59
      %p61 = scmp.ne.s32.totalorder %s50, %s51
      %p62 = scmp.eq.s32.totalorder %s21, 0
      %p63 = por %p61, %p62
      %p64 = scmp.ne.s32.totalorder %s50, %s51
      %p65 = scmp.eq.s32.totalorder %s22, 1
      %p66 = por %p64, %p65
      %p68 = scmp.ne.s32.totalorder %s51, %s67
      %p69 = scmp.eq.s32.totalorder %s22, 0
      %p70 = por %p68, %p69
      %s72 = sadd.s32 %s71, 1
      %p75 = scmp.eq.s32.totalorder %s16, 1
      %p76 = scmp.ne.s32.totalorder %s71, %s73
      %p77 = scmp.eq.s32.totalorder %s16, 0
      %p78 = por %p76, %p77
      %p79 = scmp.ne.s32.totalorder %s71, %s73
      %p80 = scmp.eq.s32.totalorder %s21, 1
      %p81 = por %p79, %p80
      %p82 = scmp.ne.s32.totalorder %s73, %s74
      %p83 = scmp.eq.s32.totalorder %s21, 0
      %p84 = por %p82, %p83
      %p85 = scmp.ne.s32.totalorder %s73, %s74
      %p86 = scmp.eq.s32.totalorder %s22, 1
      %p87 = por %p85, %p86
      %p89 = scmp.ne.s32.totalorder %s74, %s88
      %p90 = scmp.eq.s32.totalorder %s22, 0
      %p91 = por %p89, %p90
      %s93 = sadd.s32 %s92, 1
      %p96 = scmp.eq.s32.totalorder %s16, 1
      %p97 = scmp.ne.s32.totalorder %s92, %s94
      %p98 = scmp.eq.s32.totalorder %s16, 0
      %p99 = por %p97, %p98
      %p100 = scmp.ne.s32.totalorder %s92, %s94
      %p101 = scmp.eq.s32.totalorder %s21, 1
      %p102 = por %p100, %p101
      %p103 = scmp.ne.s32.totalorder %s94, %s95
      %p104 = scmp.eq.s32.totalorder %s21, 0
      %p105 = por %p103, %p104
      %p106 = scmp.ne.s32.totalorder %s94, %s95
      %p107 = scmp.eq.s32.totalorder %s22, 1
      %p108 = por %p106, %p107
      %p110 = scmp.ne.s32.totalorder %s95, %s109
      %p111 = scmp.eq.s32.totalorder %s22, 0
      %p112 = por %p110, %p111
      %s113 = ssub.s32 %s23, %s42
      %s114 = ssub.s32 %s25, %s34
      %s115 = sor.u32 %s113, %s114
      %p116 = scmp.eq.s32.totalorder %s115, 0
      %s118 = sadd.s32 %s117, 1
      %s119 = scalar_select %p116, %s117, %s118
      %p122 = pneg %p116
      %p123 = scmp.eq.s32.totalorder %s16, 1
      %p124 = por %p122, %p123
      %p125 = scmp.ne.s32.totalorder %s117, %s120
      %p126 = scmp.eq.s32.totalorder %s16, 0
      %p127 = por %p125, %p126
      %p128 = scmp.ne.s32.totalorder %s117, %s120
      %p129 = scmp.eq.s32.totalorder %s21, 1
      %p130 = por %p128, %p129
      %p131 = scmp.ne.s32.totalorder %s120, %s121
      %p132 = scmp.eq.s32.totalorder %s21, 0
      %p133 = por %p131, %p132
      %p134 = scmp.ne.s32.totalorder %s120, %s121
      %p135 = scmp.eq.s32.totalorder %s22, 1
      %p136 = por %p134, %p135
      %p138 = scmp.ne.s32.totalorder %s121, %s137
      %p139 = scmp.eq.s32.totalorder %s22, 0
      %p140 = por %p138, %p139
      %p141 = scmp.le.s32.totalorder 1, %s16
      %p142 = scmp.lt.s32.totalorder %s16, 3
      %p143 = pnand %p141, %p142
      %p144 = pneg %p143
      // Predicated region
      $region9: #{tpu_custom_call.1} parent=5 // pred_check
        _
      $region10: #{tpu_custom_call.1} parent=5 // pred_check_branch
        %146 = sbr.rel (%p143) target = $region12
      $region11: #{tpu_custom_call.1} parent=5 // pred_region
        %s147 = ssub.s32 %s16, 1
        // Predicated region
        $region13: #{tpu_custom_call.1} parent=11 // pred_check
          %p148 = pneg %p84
        $region14: #{tpu_custom_call.1} parent=11 // pred_check_branch
          %150 = sbr.rel (%p148) target = $region16
        $region15: #{tpu_custom_call.1} parent=11 // pred_region
          %s152 = ssub.s32 512, 512
          %153 = vsyncadd [#allocation6], %s152
          %s154 = sshll.u32 [#allocation5], 4
          %s155 = int_to_ptr.vmem [resolvable:$true] %s154
          %160 = dma.hbm_to_vmem [thread:$0]  %s1, 512, %s155, [#allocation6], 128, 128, 8
        $region16: #{tpu_custom_call.1} parent=11 // pred_fallthru
          _
        // Predicated region
        $region17: #{tpu_custom_call.1} parent=11 // pred_check
          %p161 = pneg %p105
        $region18: #{tpu_custom_call.1} parent=11 // pred_check_branch
          %163 = sbr.rel (%p161) target = $region20
        $region19: #{tpu_custom_call.1} parent=11 // pred_region
          _
        $region20: #{tpu_custom_call.1} parent=11 // pred_fallthru
          _
      $region12: #{tpu_custom_call.1} parent=5 // pred_fallthru
        _
      %p164 = scmp.lt.s32.totalorder %s16, 2
      // Predicated region
      $region21: #{tpu_custom_call.1} parent=5 // pred_check
        %p165 = pneg %p164
      $region22: #{tpu_custom_call.1} parent=5 // pred_check_branch
        %167 = sbr.rel (%p165) target = $region24
      $region23: #{tpu_custom_call.1} parent=5 // pred_region
        // Predicated region
        $region25: #{tpu_custom_call.1} parent=23 // pred_check
          %p168 = pneg %p57
        $region26: #{tpu_custom_call.1} parent=23 // pred_check_branch
          %170 = sbr.rel (%p168) target = $region28
        $region27: #{tpu_custom_call.1} parent=23 // pred_region
          %s171 = sand.u32 %s47, 1
          %s172 = scalar_lea.sflag [#allocation3], %s171
          %s173 = sand.u32 %s47, 1
          %s174 = smul.addr %s173, 8
          %s175 = scalar_lea.vmem [#allocation2], %s174
          %s177 = ssub.s32 128, 128
          %178 = vsyncadd %s172, %s177
          %s179 = sadd.s32 %s25, %s23
          %s180 = smul.addr %s179, 128
          %s181 = scalar_lea.hbm %s0, %s180
          %s183 = sshll.u32 %s175, 4
          %s184 = int_to_ptr.vmem [resolvable:$true] %s183
          %186 = dma.hbm_to_vmem [thread:$0]  %s181, 128, %s184, %s172
        $region28: #{tpu_custom_call.1} parent=23 // pred_fallthru
          _
      $region24: #{tpu_custom_call.1} parent=5 // pred_fallthru
        _
      %p187 = scmp.le.s32.totalorder 1, %s16
      %p188 = scmp.lt.s32.totalorder %s16, 3
      %p189 = pnand %p187, %p188
      %p190 = pneg %p189
      // Predicated region
      $region29: #{tpu_custom_call.1} parent=5 // pred_check
        _
      $region30: #{tpu_custom_call.1} parent=5 // pred_check_branch
        %192 = sbr.rel (%p189) target = $region32
      $region31: #{tpu_custom_call.1} parent=5 // pred_region
        %s193 = ssub.s32 %s16, 1
        %s194 = sand.u32 %s50, 1
        %s195 = scalar_lea.sflag [#allocation3], %s194
        %s196 = sand.u32 %s50, 1
        %s197 = smul.addr %s196, 8
        %s198 = scalar_lea.vmem [#allocation2], %s197
        // Predicated region
        $region33: #{tpu_custom_call.1} parent=31 // pred_check
          %p199 = pneg %p63
        $region34: #{tpu_custom_call.1} parent=31 // pred_check_branch
          %201 = sbr.rel (%p199) target = $region36
        $region35: #{tpu_custom_call.1} parent=31 // pred_region
          %202 = dma.done %s195, 128
        $region36: #{tpu_custom_call.1} parent=31 // pred_fallthru
          _
        // Predicated region
        $region37: #{tpu_custom_call.1} parent=31 // pred_check
          %p203 = pneg %p84
        $region38: #{tpu_custom_call.1} parent=31 // pred_check_branch
          %205 = sbr.rel (%p203) target = $region40
        $region39: #{tpu_custom_call.1} parent=31 // pred_region
          %206 = dma.done [#allocation6], 512
        $region40: #{tpu_custom_call.1} parent=31 // pred_fallthru
          _
        %s207 = sand.u32 %s50, 1
        %s208 = scalar_lea.sflag [#allocation3], %s207
        %s209 = sand.u32 %s50, 1
        %s210 = smul.addr %s209, 8
        %s211 = scalar_lea.vmem [#allocation2], %s210
        %p212 = pneg %p63
        %p213 = pneg %p60
        %p214 = pneg %p84
        %p215 = pneg %p81
        %p216 = pneg %p105
        %p217 = pneg %p102
        %p218 = pneg %p133
        %p219 = pneg %p130
        %s220 = sand.u32 %s120, 1
        %s221 = scalar_lea.sflag [#allocation4], %s220
        %s222 = sand.u32 %s120, 1
        %s223 = smul.addr %s222, 96
        %s224 = scalar_lea.vmem [#allocation7], %s223
        %v225 = vld [vmem:[%s198] sm:$0xff]
        %v226 = vld [vmem:[#allocation5] sm:$0xff]
        %v227 = vld [vmem:[#allocation5 + $0x8] sm:$0xff]
        %v228 = vld [vmem:[#allocation5 + $0x10] sm:$0xff]
        %v229 = vld [vmem:[#allocation5 + $0x18] sm:$0xff]
        %v230 = vld [vmem:[%s2] sm:$0x1]
        %v232 = vlaneseq
        %v233 = vshrl.u32 %v232, 7
        %v234 = vsub.s32 0, %v233
        %v235 = vrot.slane %v230, %v234
        %vm237 = vcmask 261120
        %v239 = vsel %vm237, %v225, 0
        %241 = vmatprep.subr.mxu0 0.0
        %242 = vmatpush1.msra.mxu0 %v226
        %243 = vmatprep.subr.mxu0 0.0
        %244 = vmatpush1.msra.mxu0 %v227
        %245 = vmatprep.subr.mxu0 0.0
        %246 = vmatpush1.msra.mxu0 %v228
        %247 = vmatprep.subr.mxu0 0.0
        %248 = vmatpush1.msra.mxu0 %v229
        %249 = vmatprep.subr.mxu0 0.0
        %250 = vmatpush1.msra.mxu0 0.0
        %251 = vmatprep.subr.mxu0 0.0
        %252 = vmatpush1.msra.mxu0 0.0
        %253 = vmatprep.subr.mxu0 0.0
        %254 = vmatpush1.msra.mxu0 0.0
        %255 = vmatprep.subr.mxu0 0.0
        %256 = vmatpush1.msra.mxu0 0.0
        %257 = vmatprep.subr.mxu0 0.0
        %258 = vmatpush1.msra.mxu0 0.0
        %259 = vmatprep.subr.mxu0 0.0
        %260 = vmatpush1.msra.mxu0 0.0
        %261 = vmatprep.subr.mxu0 0.0
        %262 = vmatpush1.msra.mxu0 0.0
        %263 = vmatprep.subr.mxu0 0.0
        %264 = vmatpush1.msra.mxu0 0.0
        %265 = vmatprep.subr.mxu0 0.0
        %266 = vmatpush1.msra.mxu0 0.0
        %267 = vmatprep.subr.mxu0 0.0
        %268 = vmatpush1.msra.mxu0 0.0
        %269 = vmatprep.subr.mxu0 0.0
        %270 = vmatpush1.msra.mxu0 0.0
        %271 = vmatprep.subr.mxu0 0.0
        %272 = vmatpush1.msra.mxu0 0.0
        %273 = vmatprep.subr.mxu0 0.0
        %274 = vmatpush1.msra.mxu0 0.0
        %275 = vmatprep.subr.mxu0 0.0
        %276 = vmatpush1.msra.mxu0 0.0
        %277 = vmatprep.subr.mxu0 0.0
        %278 = vmatpush1.msra.mxu0 0.0
        %279 = vmatprep.subr.mxu0 0.0
        %280 = vmatpush1.msra.mxu0 0.0
        %281 = vmatprep.subr.mxu0 0.0
        %282 = vmatpush1.msra.mxu0 0.0
        %283 = vmatprep.subr.mxu0 0.0
        %284 = vmatpush1.msra.mxu0 0.0
        %285 = vmatprep.subr.mxu0 0.0
        %286 = vmatpush1.msra.mxu0 0.0
        %287 = vmatprep.subr.mxu0 0.0
        %288 = vmatpush1.msra.mxu0 0.0
        %289 = vmatprep.subr.mxu0 0.0
        %290 = vmatpush1.msra.mxu0 0.0
        %291 = vmatprep.subr.mxu0 0.0
        %292 = vmatpush1.msra.mxu0 0.0
        %293 = vmatprep.subr.mxu0 0.0
        %294 = vmatpush1.msra.mxu0 0.0
        %295 = vmatprep.subr.mxu0 0.0
        %296 = vmatpush1.msra.mxu0 0.0
        %297 = vmatprep.subr.mxu0 0.0
        %298 = vmatpush1.msra.mxu0 0.0
        %299 = vmatprep.subr.mxu0 0.0
        %300 = vmatpush1.msra.mxu0 0.0
        %301 = vmatprep.subr.mxu0 0.0
        %302 = vmatpush1.msra.mxu0 0.0
        %303 = vmatprep.subr.mxu0 0.0
        %304 = vmatpush1.msra.mxu0 0.0
        %305 = vmatprep.mubr.f32.mxu0 0.0
        %306 = vmatmul.mubr.f32.gmra.mrb[0].mxu0 %v239
        %v307 = vpop.f32.mrb[0].mxu0
        %v308 = vadd.f32 %v235, %v307
        %v309 = vpop.f32.mrb[0].mxu0
        %310 = vdwg.mxu0
        %vm311 = vcmask 64512
        %312 = vst.msk [vmem:[%s224] sm:$0xff] %vm311, %v308
        %314 = vrot.lane.b32.xlu0 %v308, 120
        %v315 = vpop.permute.xlu0 %314
        %s317 = scalar_lea.vmem %s224, 8 [#allocation7]
        %318 = vst.msk [vmem:[%s317] sm:$0xff] %vm311, %v315
        %319 = vrot.lane.b32.xlu0 %v308, 112
        %v320 = vpop.permute.xlu0 %319
        %s322 = scalar_lea.vmem %s224, 16 [#allocation7]
        %323 = vst.msk [vmem:[%s322] sm:$0xff] %vm311, %v320
        %324 = vrot.lane.b32.xlu0 %v308, 104
        %v325 = vpop.permute.xlu0 %324
        %s327 = scalar_lea.vmem %s224, 24 [#allocation7]
        %328 = vst.msk [vmem:[%s327] sm:$0xff] %vm311, %v325
        %329 = vrot.lane.b32.xlu0 %v308, 96
        %v330 = vpop.permute.xlu0 %329
        %s332 = scalar_lea.vmem %s224, 32 [#allocation7]
        %333 = vst.msk [vmem:[%s332] sm:$0xff] %vm311, %v330
        %334 = vrot.lane.b32.xlu0 %v308, 88
        %v335 = vpop.permute.xlu0 %334
        %s337 = scalar_lea.vmem %s224, 40 [#allocation7]
        %338 = vst.msk [vmem:[%s337] sm:$0xff] %vm311, %v335
        %339 = vrot.lane.b32.xlu0 %v308, 80
        %v340 = vpop.permute.xlu0 %339
        %s342 = scalar_lea.vmem %s224, 48 [#allocation7]
        %343 = vst.msk [vmem:[%s342] sm:$0xff] %vm311, %v340
        %344 = vrot.lane.b32.xlu0 %v308, 72
        %v345 = vpop.permute.xlu0 %344
        %s347 = scalar_lea.vmem %s224, 56 [#allocation7]
        %348 = vst.msk [vmem:[%s347] sm:$0xff] %vm311, %v345
        %349 = vrot.lane.b32.xlu0 %v308, 64
        %v350 = vpop.permute.xlu0 %349
        %s352 = scalar_lea.vmem %s224, 64 [#allocation7]
        %353 = vst.msk [vmem:[%s352] sm:$0xff] %vm311, %v350
        %354 = vrot.lane.b32.xlu0 %v308, 56
        %v355 = vpop.permute.xlu0 %354
        %s357 = scalar_lea.vmem %s224, 72 [#allocation7]
        %358 = vst.msk [vmem:[%s357] sm:$0xff] %vm311, %v355
        %359 = vrot.lane.b32.xlu0 %v308, 48
        %v360 = vpop.permute.xlu0 %359
        %s362 = scalar_lea.vmem %s224, 80 [#allocation7]
        %363 = vst.msk [vmem:[%s362] sm:$0xff] %vm311, %v360
        %364 = vrot.lane.b32.xlu0 %v308, 40
        %v365 = vpop.permute.xlu0 %364
        %s367 = scalar_lea.vmem %s224, 88 [#allocation7]
        %368 = vst.msk [vmem:[%s367] sm:$0xff] %vm311, %v365
        %s369 = sand.u32 %s120, 1
        %s370 = scalar_lea.sflag [#allocation4], %s369
        %s371 = sand.u32 %s120, 1
        %s372 = smul.addr %s371, 96
        %s373 = scalar_lea.vmem [#allocation7], %s372
        // Predicated region
        $region41: #{tpu_custom_call.1} parent=31 // pred_check
          %p374 = pneg %p130
        $region42: #{tpu_custom_call.1} parent=31 // pred_check_branch
          %376 = sbr.rel (%p374) target = $region44
        $region43: #{tpu_custom_call.1} parent=31 // pred_region
          #allocation9 [shape = 'u32[6]{0}', space=smem, size = 0x18, scoped, tag = 'DMA stride descriptor']
          %s378 = ssub.s32 1536, 1536
          %379 = vsyncadd %s370, %s378
          %s380 = smul.addr %s26, 4
          %s381 = sadd.s32 %s28, %s380
          %s382 = smul.addr %s381, 128
          %s383 = scalar_lea.hbm %s3, %s382
          %s385 = sshll.u32 1, 14
          %s386 = sxor.u32 4294967295, %s385
          %s389 = sshll.u32 7, 18
          %s390 = sxor.u32 4294967295, %s389
          %s391 = sand.u32 0, %s390
          %s393 = sor.u32 %s391, 0
          %s395 = sshll.u32 3, 24
          %s396 = sxor.u32 4294967295, %s395
          %s397 = sand.u32 %s393, %s396
          %s399 = sor.u32 %s397, 0
          %s400 = sshll.u32 %s373, 4
          %s401 = int_to_ptr.vmem [resolvable:$true] %s400
          %407 = sst [smem:[#allocation9]] 512
          %s408 = scalar_lea.smem [#allocation9], 1
          %409 = sst [smem:[%s408]] 1024
          %s410 = scalar_lea.smem [#allocation9], 2
          %411 = sst [smem:[%s410]] 4
          %s412 = scalar_lea.smem [#allocation9], 3
          %413 = sst [smem:[%s412]] 128
          %s414 = scalar_lea.smem [#allocation9], 4
          %415 = sst [smem:[%s414]] 128
          %s416 = scalar_lea.smem [#allocation9], 5
          %417 = sst [smem:[%s416]] 8
          %419 = dma.general %s401, 1536, %s383, %s370, [#allocation8], [#allocation9], %s399, 0
        $region44: #{tpu_custom_call.1} parent=31 // pred_fallthru
          _
      $region32: #{tpu_custom_call.1} parent=5 // pred_fallthru
        _
      %p420 = scmp.le.s32.totalorder 2, %s16
      // Predicated region
      $region45: #{tpu_custom_call.1} parent=5 // pred_check
        %p421 = pneg %p420
      $region46: #{tpu_custom_call.1} parent=5 // pred_check_branch
        %423 = sbr.rel (%p421) target = $region48
      $region47: #{tpu_custom_call.1} parent=5 // pred_region
        %s424 = ssub.s32 %s16, 2
        // Predicated region
        $region49: #{tpu_custom_call.1} parent=47 // pred_check
          %p425 = pneg %p136
        $region50: #{tpu_custom_call.1} parent=47 // pred_check_branch
          %427 = sbr.rel (%p425) target = $region52
        $region51: #{tpu_custom_call.1} parent=47 // pred_region
          %s428 = sand.u32 %s121, 1
          %s429 = scalar_lea.sflag [#allocation4], %s428
          %s430 = sand.u32 %s121, 1
          %s431 = smul.addr %s430, 96
          %s432 = scalar_lea.vmem [#allocation7], %s431
          %433 = dma.done %s429, 1536
        $region52: #{tpu_custom_call.1} parent=47 // pred_fallthru
          _
      $region48: #{tpu_custom_call.1} parent=5 // pred_fallthru
        _
    $region6: #{tpu_custom_call.1} parent=1 // loop_footer
      %s20 = sadd.s32 1, %s16
    $region7: #{tpu_custom_call.1} parent=1 // loop_footer_branch
      %15 = sbr.rel target = $region3
    $region8: #{tpu_custom_call.1} parent=1 // loop_exit
      _
    %434 = vsyncpa [#allocation3], 1
    %s435 = scalar_lea.sflag [#allocation3], 1
    %436 = vsyncpa %s435, 1
    %437 = vsyncpa [#allocation6], 1
    %438 = vsyncpa [#allocation4], 1
    %s439 = scalar_lea.sflag [#allocation4], 1
    %440 = vsyncpa %s439, 1

</llo_original>
